<compile_context>
chip_gen: v7x
topology: tpu7x:2x2x1
jax: 0.10.0
libtpu: 0.0.40
codegen_flags: <defaults>
</compile_context>

<pallas_src>
import jax
import jax.numpy as jnp
from jax.experimental import pallas as pl
from jax.experimental.pallas import tpu as pltpu


def _cond_kernel(x_ref, o_ref):
    x = x_ref[...]
    s = jnp.sum(x)                                   # scalar reduction
    off = jnp.where(s > 0.0, 1.0, -1.0).astype(x.dtype)   # scalar +/-1
    o_ref[...] = x + off                             # single vadd per vreg


@jax.jit
def cond_model(x):
    """Forward pass of CondModel. x: float32 array, NCHW."""
    orig_shape = x.shape
    n_elem = x.size
    lanes = 128
    assert n_elem % lanes == 0, "pad not implemented for this demo shape"
    rows = n_elem // lanes
    x2d = x.reshape(rows, lanes)                     # glue: layout plumbing only

    out2d = pl.pallas_call(
        _cond_kernel,
        out_shape=jax.ShapeDtypeStruct((rows, lanes), x.dtype),
        in_specs=[pl.BlockSpec(memory_space=pltpu.MemorySpace.VMEM)],
        out_specs=pl.BlockSpec(memory_space=pltpu.MemorySpace.VMEM),
        input_output_aliases={0: 0},                 # in-place elementwise update
    )(x2d)

    return out2d.reshape(orig_shape)


if __name__ == "__main__":
    key = jax.random.PRNGKey(0)
    # CondModel has no parameters; just a deterministic input.
    x = jax.random.normal(key, (2, 4, 16, 16), dtype=jnp.float32)

    out = jax.block_until_ready(cond_model(x))

    # Reference check (pure JAX, mirrors torch.cond semantics).
    ref = jnp.where(jnp.sum(x) > 0, x + 1.0, x - 1.0)
    assert out.shape == x.shape and out.dtype == x.dtype
    assert jnp.allclose(out, ref), "mismatch vs reference"

    # Exercise both branches to make sure the predicate is live.
    x_neg = -jnp.abs(x)
    out_neg = jax.block_until_ready(cond_model(x_neg))
    assert jnp.allclose(out_neg, x_neg - 1.0), "false-branch mismatch"

    x_pos = jnp.abs(x)
    out_pos = jax.block_until_ready(cond_model(x_pos))
    assert jnp.allclose(out_pos, x_pos + 1.0), "true-branch mismatch"

    print("KERNEL_OK")
</pallas_src>

<mosaic_0001>
module attributes {stable_mosaic.version = 11 : i64} {
  func.func @_cond_kernel(%arg0: memref<16x128xf32, #tpu.memory_space<vmem>>, %arg1: memref<16x128xf32, #tpu.memory_space<vmem>>) attributes {dimension_semantics = [], scalar_prefetch = 0 : i64, scratch_operands = 0 : i64, tpu.core_type = #tpu.core_type<tc>} {
    %c0 = arith.constant 0 : index
    %c0_0 = arith.constant 0 : index
    %0 = vector.load %arg0[%c0, %c0_0] : memref<16x128xf32, #tpu.memory_space<vmem>>, vector<16x128xf32>
    %1 = vector.shape_cast %0 : vector<16x128xf32> to vector<1x16x128xf32>
    %cst = arith.constant dense<0.000000e+00> : vector<1xf32>
    %2 = vector.multi_reduction <add>, %1, %cst [1, 2] : vector<1x16x128xf32> to vector<1xf32>
    %3 = vector.shape_cast %2 : vector<1xf32> to vector<1x1x1xf32>
    %4 = vector.extract %3[0, 0, 0] : f32 from vector<1x1x1xf32>
    %cst_1 = arith.constant 0.000000e+00 : f32
    %5 = arith.cmpf ogt, %4, %cst_1 : f32
    %cst_2 = arith.constant 1.000000e+00 : f32
    %cst_3 = arith.constant -1.000000e+00 : f32
    %6 = arith.select %5, %cst_2, %cst_3 : f32
    %7 = vector.broadcast %6 : f32 to vector<16x128xf32>
    %8 = arith.addf %0, %7 : vector<16x128xf32>
    %c0_4 = arith.constant 0 : index
    %c0_5 = arith.constant 0 : index
    %9 = vector.load %arg1[%c0_4, %c0_5] : memref<16x128xf32, #tpu.memory_space<vmem>>, vector<16x128xf32>
    tpu.vector_store %arg1[%c0_4, %c0_5], %8 {strides = array<i32>} : memref<16x128xf32, #tpu.memory_space<vmem>>, vector<16x128xf32>,
    return
  }
}

</mosaic_0001>

<llo_original>
// kernel: cond_model.1
$region0: #{cond_model.1}
  #allocation0 [shape = 'u32[]', space=smem, size = 0x4, offset = 0x4, fixed_abs, tag = 'smem constant byte address 0x4 - core index']
  #allocation1 [shape = 'u32[144,128]{1,0:T(1,128)}', space=vmem, size = 0x12000, scoped, tag = 'internal scratch']
  %s0 = inlined_call_operand.vmem [shape: f32[16,128], index: 0, kind: input, shape index: {}, may-alias: {0,1}]
  %s1 = inlined_call_operand.vmem [shape: f32[16,128], index: 1, kind: output, shape index: {}, may-alias: {0,1}]
  %s2 = sld [smem:[#allocation0]]
  $region14: #{cond_model.1} parent=0
    _
  %s4 = ssub.s32 1, %s2
  %s5 = scalar_select 0, %s4, %s2
  // Predicated region
  $region2: #{cond_model.1} parent=0 // pred_check
    _
  $region3: #{cond_model.1} parent=0 // pred_check_branch
    %7 = sbr.rel (0) target = $region5
  $region4: #{cond_model.1} parent=0 // pred_region
    _
  $region5: #{cond_model.1} parent=0 // pred_fallthru
    _
  %v8 = vld [vmem:[%s0] sm:$0xff]
  %v9 = vld [vmem:[%s0 + $0x8] sm:$0xff]
  %v10 = vadd.f32 %v8, %v9
  %11 = vadd.xlane.f32.xlu0 %v10
  %v12 = vpop.xlane.xlu0 %11
  %v13 = vrot.slane %v12, 4
  %v14 = vadd.f32 %v12, %v13
  %v15 = vrot.slane %v14, 2
  %v16 = vadd.f32 %v14, %v15
  %v17 = vrot.slane %v16, 1
  %v18 = vadd.f32 %v16, %v17
  %s19 = vtos %v18
  %p20 = scmp.gt.f32.partialorder %s19, 0.0
  %s21 = scalar_select %p20, 1.0, -1.0
  %v22 = vstv %s21
  %v23 = vadd.f32 %v8, %v22
  %v24 = vadd.f32 %v9, %v22
  %25 = vst [vmem:[%s1] sm:$0xff] %v23
  %26 = vst [vmem:[%s1 + $0x8] sm:$0xff] %v24
  // Predicated region
  $region6: #{cond_model.1} parent=0 // pred_check
    _
  $region7: #{cond_model.1} parent=0 // pred_check_branch
    %28 = sbr.rel (0) target = $region9
  $region8: #{cond_model.1} parent=0 // pred_region
    _
  $region9: #{cond_model.1} parent=0 // pred_fallthru
    _
  // Predicated region
  $region10: #{cond_model.1} parent=0 // pred_check
    _
  $region11: #{cond_model.1} parent=0 // pred_check_branch
    %30 = sbr.rel (0) target = $region13
  $region12: #{cond_model.1} parent=0 // pred_region
    _
  $region13: #{cond_model.1} parent=0 // pred_fallthru
    _

</llo_original>
